<compile_context>
chip_gen: v5e
topology: v5e:2x2
jax: 0.10.0
libtpu: 0.0.40
codegen_flags: <defaults>
</compile_context>

<pallas_src>
import jax
import jax.numpy as jnp
from jax.experimental import pallas as pl
from jax.experimental.pallas import tpu as pltpu


def _softmax_weight_kernel(w_ref, p_ref):
    # w_ref: (K, C, THW) raw weights; p_ref: (K, C, THW) softmax over C (axis=1).
    w = w_ref[...].astype(jnp.float32)
    m = jnp.max(w, axis=1, keepdims=True)
    e = jnp.exp(w - m)
    p_ref[...] = e / jnp.sum(e, axis=1, keepdims=True)


def _spatial_sum_kernel(x_ref, p_ref, o_ref):
    # x_ref: (TN, C, THW)  tile of input log-likelihoods (f32 or bf16)
    # p_ref: (K, C, THW)   softmax(weight) over C (batch-invariant, f32)
    # o_ref: (TN, K, THW)  output log-likelihoods (f32)
    C = x_ref.shape[1]
    K = p_ref.shape[0]
    neg_inf = jnp.float32(-jnp.inf)

    def xs(c):
        # (TN, THW) per-channel slice; upcast in VMEM (x may arrive as bf16).
        return x_ref[:, c, :].astype(jnp.float32)

    # Pass 1: shift mx = max_c x. Pure VPU maxes on (TN, THW) slabs.
    mx = xs(0)
    for c in range(1, C):
        mx = jnp.maximum(mx, xs(c))

    # Pass 2: a_c = exp(x_c - mx). Only C exps per (n, hw) element on the EUP;
    # the weight-side exp was hoisted into the batch-invariant prep kernel.
    a = [jnp.exp(xs(c) - mx) for c in range(C)]

    # Pass 3: per output channel k, s = sum_c a_c * p[k, c]; out = mx + log(s).
    # Multiply-accumulate on the 4-wide VALU, one log per output element.
    # NOTE: for large C switch these static loops to lax.fori_loop(unroll=2-4).
    for k in range(K):
        s = a[0] * p_ref[k, 0:1, :]
        for c in range(1, C):
            s = s + a[c] * p_ref[k, c:c + 1, :]
        # If every mixture input is -inf (dropout), mx == -inf and s is NaN:
        # return -inf like torch.logsumexp. Underflowed s==0 also yields -inf.
        o_ref[:, k, :] = jnp.where(mx == neg_inf, neg_inf, mx + jnp.log(s))


def _pick_hw_tile(hw: int, max_tile: int = 512) -> int:
    """Largest multiple-of-128 divisor of hw that is <= max_tile (hw % 128 == 0)."""
    t = min(hw, max_tile)
    t -= t % 128
    t = max(t, 128)
    while hw % t != 0:
        t -= 128
    return t


def spatial_sum_forward(x, weight, *, max_batch_tile: int = 8):
    """x: (N, C, H, W); weight: (K, C, H, W) -> (N, K, H, W) float32."""
    N, C, H, W = x.shape
    K = weight.shape[0]
    HW = H * W

    # ---- tiling -------------------------------------------------------------
    # Lane axis = flattened HW. No padding: tile HW in multiples of 128, or
    # (if HW % 128 != 0) use the full dim as a single block.
    if HW % 128 == 0:
        THW = _pick_hw_tile(HW)
    else:
        THW = HW
    n_hw = pl.cdiv(HW, THW)

    # Batch tile: several rows per step to amortize per-step overhead, capped
    # so each (TN, C|K, THW) working slab stays ~vreg-file sized.
    slab_cap = 16384  # f32 elements
    TN = max(1, min(max_batch_tile, N, slab_cap // max(1, max(C, K) * THW)))

    # Static VMEM budget check (v7x: 64 MiB physical / 32 MiB default scoped):
    # double-buffered x + p + out tiles must fit with headroom.
    def _vmem_bytes(tn, thw):
        return 2 * (tn * C + K * C + tn * K) * thw * 4

    while _vmem_bytes(TN, THW) > 24 * 1024 * 1024 and TN > 1:
        TN = max(1, TN // 2)

    # v7x has 2 TensorCores: make sure a parallel axis has >= 2 grid steps.
    if n_hw * pl.cdiv(N, TN) < 2:
        if N >= 2:
            TN = pl.cdiv(N, 2)
        elif THW % 256 == 0:
            THW //= 2
            n_hw = pl.cdiv(HW, THW)
    n_b = pl.cdiv(N, TN)

    # ---- batch-invariant weight prep: p = softmax(weight, dim=1) ------------
    if weight.dtype != jnp.float32 and weight.dtype != jnp.bfloat16:
        weight = weight.astype(jnp.float32)
    w_in = weight.reshape(K, C, HW)

    p = pl.pallas_call(
        _softmax_weight_kernel,
        out_shape=jax.ShapeDtypeStruct((K, C, HW), jnp.float32),
        grid_spec=pltpu.PrefetchScalarGridSpec(
            num_scalar_prefetch=0,
            grid=(n_hw,),
            in_specs=[pl.BlockSpec((K, C, THW), lambda h: (0, 0, h))],
            out_specs=pl.BlockSpec((K, C, THW), lambda h: (0, 0, h)),
        ),
        compiler_params=pltpu.CompilerParams(
            dimension_semantics=("parallel",)),
    )(w_in)

    # ---- main batched kernel -------------------------------------------------
    # x is NOT padded or upcast in the wrapper: the ragged last batch tile is
    # handled by the cdiv grid, and bf16 inputs are upcast per-tile in-kernel.
    if x.dtype != jnp.float32 and x.dtype != jnp.bfloat16:
        x = x.astype(jnp.float32)
    x_in = x.reshape(N, C, HW)

    out = pl.pallas_call(
        _spatial_sum_kernel,
        out_shape=jax.ShapeDtypeStruct((N, K, HW), jnp.float32),
        grid_spec=pltpu.PrefetchScalarGridSpec(
            num_scalar_prefetch=0,
            # HW tiles outer so the weight tile stays resident across the inner
            # batch loop; both axes fully parallel (megacore sharding).
            grid=(n_hw, n_b),
            in_specs=[
                pl.BlockSpec((TN, C, THW), lambda h, n: (n, 0, h)),
                pl.BlockSpec((K, C, THW), lambda h, n: (0, 0, h)),
            ],
            out_specs=pl.BlockSpec((TN, K, THW), lambda h, n: (n, 0, h)),
        ),
        compiler_params=pltpu.CompilerParams(
            dimension_semantics=("parallel", "parallel")),
    )(x_in, p)

    return out.reshape(N, K, H, W)


def reference_forward(x, weight):
    """Pure-JAX reference matching the PyTorch forward (eval mode)."""
    w = jax.nn.log_softmax(weight.astype(jnp.float32), axis=1)   # (K, C, H, W)
    t = x.astype(jnp.float32)[:, None] + w[None]                 # (N, K, C, H, W)
    return jax.scipy.special.logsumexp(t, axis=2)                # (N, K, H, W)


if __name__ == "__main__":
    key = jax.random.PRNGKey(0)
    k_w, k_x = jax.random.split(key)

    N, C, H, W = 2, 4, 16, 16          # in_features = (C, H, W)
    K = 4                              # out_channels

    # Stand-in for dirichlet_ init: any finite weights define the same forward.
    weight = jax.random.normal(k_w, (K, C, H, W), dtype=jnp.float32)
    x = jax.random.normal(k_x, (N, C, H, W), dtype=jnp.float32)

    # TODO(synk): training-time leaf dropout (x[rand < p] = -inf) is not applied
    # in-kernel; this matches eval semantics (model.eval() / dropout=None).

    out = jax.block_until_ready(spatial_sum_forward(x, weight))
    ref = reference_forward(x, weight)
    assert out.shape == (N, K, H, W)
    assert jnp.allclose(out, ref, atol=1e-4, rtol=1e-4), \
        float(jnp.max(jnp.abs(out - ref)))

    # Exercise the -inf guard (what dropout would feed at train time).
    x_drop = x.at[0, :, 3, 5].set(-jnp.inf)
    out_d = jax.block_until_ready(spatial_sum_forward(x_drop, weight))
    ref_d = reference_forward(x_drop, weight)
    finite = jnp.isfinite(ref_d)
    close = jnp.abs(out_d - ref_d) <= 1e-4 + 1e-4 * jnp.abs(ref_d)
    assert bool(jnp.all(jnp.where(finite, close, out_d == ref_d)))

    print("KERNEL_OK")
</pallas_src>

<mosaic_0001>
module attributes {stable_mosaic.version = 11 : i64} {
  func.func @_softmax_weight_kernel(%arg0: i32, %arg1: memref<4x4x256xf32, #tpu.memory_space<vmem>>, %arg2: memref<4x4x256xf32, #tpu.memory_space<vmem>>) attributes {dimension_semantics = [#tpu.dimension_semantics<parallel>], iteration_bounds = array<i64: 1>, scalar_prefetch = 0 : i64, scratch_operands = 0 : i64, tpu.core_type = #tpu.core_type<tc>, window_params = [{transform_indices = @transform_0, window_bounds = array<i64: 4, 4, 256>}, {transform_indices = @transform_1, window_bounds = array<i64: 4, 4, 256>}]} {
    %c0 = arith.constant 0 : index
    %c0_0 = arith.constant 0 : index
    %c0_1 = arith.constant 0 : index
    %0 = vector.load %arg1[%c0, %c0_0, %c0_1] : memref<4x4x256xf32, #tpu.memory_space<vmem>>, vector<4x4x256xf32>
    %cst = arith.constant dense<0xFF800000> : vector<4x256xf32>
    %1 = vector.multi_reduction <maximumf>, %0, %cst [1] : vector<4x4x256xf32> to vector<4x256xf32>
    %2 = vector.shape_cast %1 : vector<4x256xf32> to vector<4x1x256xf32>
    %3 = vector.broadcast %2 : vector<4x1x256xf32> to vector<4x4x256xf32>
    %4 = arith.subf %0, %3 : vector<4x4x256xf32>
    %5 = math.exp %4 : vector<4x4x256xf32>
    %cst_2 = arith.constant dense<0.000000e+00> : vector<4x256xf32>
    %6 = vector.multi_reduction <add>, %5, %cst_2 [1] : vector<4x4x256xf32> to vector<4x256xf32>
    %7 = vector.shape_cast %6 : vector<4x256xf32> to vector<4x1x256xf32>
    %8 = vector.broadcast %7 : vector<4x1x256xf32> to vector<4x4x256xf32>
    %9 = arith.divf %5, %8 : vector<4x4x256xf32>
    %c0_3 = arith.constant 0 : index
    %c0_4 = arith.constant 0 : index
    %c0_5 = arith.constant 0 : index
    %10 = vector.load %arg2[%c0_3, %c0_4, %c0_5] : memref<4x4x256xf32, #tpu.memory_space<vmem>>, vector<4x4x256xf32>
    tpu.vector_store %arg2[%c0_3, %c0_4, %c0_5], %9 {strides = array<i32>} : memref<4x4x256xf32, #tpu.memory_space<vmem>>, vector<4x4x256xf32>,
    return
  }
  func.func @transform_0(%arg0: i32) -> (i32, i32, i32) {
    %c0_i32 = arith.constant 0 : i32
    %c0_i32_0 = arith.constant 0 : i32
    %c0_i32_1 = arith.constant 0 : i32
    return %c0_i32, %c0_i32_0, %arg0 : i32, i32, i32
  }
  func.func @transform_1(%arg0: i32) -> (i32, i32, i32) {
    %c0_i32 = arith.constant 0 : i32
    %c0_i32_0 = arith.constant 0 : i32
    %c0_i32_1 = arith.constant 0 : i32
    return %c0_i32, %c0_i32_0, %arg0 : i32, i32, i32
  }
}

</mosaic_0001>

<llo_original>
// kernel: tpu_custom_call.1
$region0: #{tpu_custom_call.1}
  #allocation0 [shape = 'u32[]', space=smem, size = 0x4, offset = 0x4, fixed_abs, tag = 'smem constant byte address 0x4 - core index']
  #allocation1 [shape = 'u32[72,128]{1,0:T(1,128)}', space=vmem, size = 0x9000, scoped, tag = 'internal scratch']
  %s0 = inlined_call_operand.hbm [shape: f32[4,4,256], index: 0, kind: input, shape index: {}]
  %s1 = inlined_call_operand.hbm [shape: f32[4,4,256], index: 1, kind: output, shape index: {}]
  %s2 = sld [smem:[#allocation0]]
  $region18: #{tpu_custom_call.1} parent=0
    _
  %s4 = ssub.s32 1, %s2
  %s5 = scalar_select 0, %s4, %s2
  $region1: #{tpu_custom_call.1} parent=0
    #allocation2 [shape = 'u8[16384]{0}', space=vmem, size = 0x4000, scoped, tag = 'input window, operand 0, single buffered']
    #allocation3 [shape = 's32[1]{0}', space=sflag, size = 0x4, scoped, tag = 'scoped memory for tpu_custom_call.1']
    #allocation4 [shape = 's32[1]{0}', space=sflag, size = 0x4, scoped, tag = 'scoped memory for tpu_custom_call.1']
    #allocation5 [shape = 'u8[16384]{0}', space=vmem, size = 0x4000, scoped, tag = 'output window, operand 0, single buffered']
    %6 = vsyncpa [#allocation3], 0
    %7 = vsyncpa [#allocation4], 0
    // Predicated region
    $region2: #{tpu_custom_call.1} parent=1 // pred_check
      _
    $region3: #{tpu_custom_call.1} parent=1 // pred_check_branch
      %9 = sbr.rel (0) target = $region5
    $region4: #{tpu_custom_call.1} parent=1 // pred_region
      %11 = vsyncadd [#allocation3], 0
      %s12 = sshll.u32 %s0, 4
      %s13 = int_to_ptr.hbm [resolvable:$true] %s12
      %s14 = sshll.u32 [#allocation2], 4
      %s15 = int_to_ptr.vmem [resolvable:$true] %s14
      %20 = dma.hbm_to_vmem [thread:$0]  %s13, 512, %s15, [#allocation3], 128, 128, 8
    $region5: #{tpu_custom_call.1} parent=1 // pred_fallthru
      _
    // Predicated region
    $region6: #{tpu_custom_call.1} parent=1 // pred_check
      _
    $region7: #{tpu_custom_call.1} parent=1 // pred_check_branch
      %22 = sbr.rel (0) target = $region9
    $region8: #{tpu_custom_call.1} parent=1 // pred_region
      %24 = dma.done [#allocation3], 512
    $region9: #{tpu_custom_call.1} parent=1 // pred_fallthru
      _
    %v25 = vld [vmem:[#allocation2] sm:$0xff]
    %v26 = vld [vmem:[#allocation2 + $0x8] sm:$0xff]
    %v27 = vld [vmem:[#allocation2 + $0x10] sm:$0xff]
    %v28 = vld [vmem:[#allocation2 + $0x18] sm:$0xff]
    %33 = vst [vmem:[#allocation1] ss:$2 sm:$0xff] %v25
    %v34 = vld.sshfl [vmem:[#allocation1] sm:$0xff pattern:$0x75316420]
    %v35 = vld.sshfl [vmem:[#allocation1 + $0x8] sm:$0xff pattern:$0x75316420]
    %s36 = scalar_lea.vmem [#allocation1], 16
    %37 = vst [vmem:[%s36] ss:$2 sm:$0xff] %v26
    %v38 = vld.sshfl [vmem:[#allocation1 + $0x10] sm:$0xff pattern:$0x75316420]
    %v39 = vld.sshfl [vmem:[#allocation1 + $0x18] sm:$0xff pattern:$0x75316420]
    %s40 = scalar_lea.vmem [#allocation1], 32
    %41 = vst [vmem:[%s40] ss:$2 sm:$0xff] %v27
    %v42 = vld.sshfl [vmem:[#allocation1 + $0x20] sm:$0xff pattern:$0x75316420]
    %v43 = vld.sshfl [vmem:[#allocation1 + $0x28] sm:$0xff pattern:$0x75316420]
    %s44 = scalar_lea.vmem [#allocation1], 48
    %45 = vst [vmem:[%s44] ss:$2 sm:$0xff] %v28
    %v46 = vld.sshfl [vmem:[#allocation1 + $0x30] sm:$0xff pattern:$0x75316420]
    %v47 = vld.sshfl [vmem:[#allocation1 + $0x38] sm:$0xff pattern:$0x75316420]
    %vm56 = vcmask 1043456
    %v57 = vsel %vm56, %v34, -inf
    %v58 = vrot.slane %v57, 4
    %v59 = vmax.f32 %v57, %v58
    %v60 = vrot.slane %v59, 2
    %v61 = vmax.f32 %v59, %v60
    %v62 = vrot.slane %v61, 1
    %v63 = vmax.f32 %v61, %v62
    %v64 = vsel %vm56, %v35, -inf
    %v65 = vrot.slane %v64, 4
    %v66 = vmax.f32 %v64, %v65
    %v67 = vrot.slane %v66, 2
    %v68 = vmax.f32 %v66, %v67
    %v69 = vrot.slane %v68, 1
    %v70 = vmax.f32 %v68, %v69
    %v71 = vsel %vm56, %v38, -inf
    %v72 = vrot.slane %v71, 4
    %v73 = vmax.f32 %v71, %v72
    %v74 = vrot.slane %v73, 2
    %v75 = vmax.f32 %v73, %v74
    %v76 = vrot.slane %v75, 1
    %v77 = vmax.f32 %v75, %v76
    %v78 = vsel %vm56, %v39, -inf
    %v79 = vrot.slane %v78, 4
    %v80 = vmax.f32 %v78, %v79
    %v81 = vrot.slane %v80, 2
    %v82 = vmax.f32 %v80, %v81
    %v83 = vrot.slane %v82, 1
    %v84 = vmax.f32 %v82, %v83
    %v85 = vsel %vm56, %v42, -inf
    %v86 = vrot.slane %v85, 4
    %v87 = vmax.f32 %v85, %v86
    %v88 = vrot.slane %v87, 2
    %v89 = vmax.f32 %v87, %v88
    %v90 = vrot.slane %v89, 1
    %v91 = vmax.f32 %v89, %v90
    %v92 = vsel %vm56, %v43, -inf
    %v93 = vrot.slane %v92, 4
    %v94 = vmax.f32 %v92, %v93
    %v95 = vrot.slane %v94, 2
    %v96 = vmax.f32 %v94, %v95
    %v97 = vrot.slane %v96, 1
    %v98 = vmax.f32 %v96, %v97
    %v99 = vsel %vm56, %v46, -inf
    %v100 = vrot.slane %v99, 4
    %v101 = vmax.f32 %v99, %v100
    %v102 = vrot.slane %v101, 2
    %v103 = vmax.f32 %v101, %v102
    %v104 = vrot.slane %v103, 1
    %v105 = vmax.f32 %v103, %v104
    %v106 = vsel %vm56, %v47, -inf
    %v107 = vrot.slane %v106, 4
    %v108 = vmax.f32 %v106, %v107
    %v109 = vrot.slane %v108, 2
    %v110 = vmax.f32 %v108, %v109
    %v111 = vrot.slane %v110, 1
    %v112 = vmax.f32 %v110, %v111
    %v121 = vrot.slane %v70, 4
    %v122 = vrot.slane %v84, 4
    %v123 = vrot.slane %v98, 4
    %v124 = vrot.slane %v112, 4
    %v125 = vsel %vm56, %v63, %v121
    %v126 = vsel %vm56, %v77, %v122
    %v127 = vsel %vm56, %v91, %v123
    %v128 = vsel %vm56, %v105, %v124
    %v133 = vsub.f32 %v25, %v125
    %v134 = vsub.f32 %v26, %v126
    %v135 = vsub.f32 %v27, %v127
    %v136 = vsub.f32 %v28, %v128
    %v137 = vmul.f32 %v133, 1.442695
    %v138 = vpow.pop %v137
    %v139 = vmul.f32 %v134, 1.442695
    %v140 = vpow.pop %v139
    %v141 = vmul.f32 %v135, 1.442695
    %v142 = vpow.pop %v141
    %v143 = vmul.f32 %v136, 1.442695
    %v144 = vpow.pop %v143
    %149 = vst [vmem:[#allocation1] ss:$2 sm:$0xff] %v138
    %v150 = vld.sshfl [vmem:[#allocation1] sm:$0xff pattern:$0x75316420]
    %v151 = vld.sshfl [vmem:[#allocation1 + $0x8] sm:$0xff pattern:$0x75316420]
    %s152 = scalar_lea.vmem [#allocation1], 16
    %153 = vst [vmem:[%s152] ss:$2 sm:$0xff] %v140
    %v154 = vld.sshfl [vmem:[#allocation1 + $0x10] sm:$0xff pattern:$0x75316420]
    %v155 = vld.sshfl [vmem:[#allocation1 + $0x18] sm:$0xff pattern:$0x75316420]
    %s156 = scalar_lea.vmem [#allocation1], 32
    %157 = vst [vmem:[%s156] ss:$2 sm:$0xff] %v142
    %v158 = vld.sshfl [vmem:[#allocation1 + $0x20] sm:$0xff pattern:$0x75316420]
    %v159 = vld.sshfl [vmem:[#allocation1 + $0x28] sm:$0xff pattern:$0x75316420]
    %s160 = scalar_lea.vmem [#allocation1], 48
    %161 = vst [vmem:[%s160] ss:$2 sm:$0xff] %v144
    %v162 = vld.sshfl [vmem:[#allocation1 + $0x30] sm:$0xff pattern:$0x75316420]
    %v163 = vld.sshfl [vmem:[#allocation1 + $0x38] sm:$0xff pattern:$0x75316420]
    %v172 = vsel %vm56, %v150, 0.0
    %v173 = vrot.slane %v172, 4
    %v174 = vadd.f32 %v172, %v173
    %v175 = vrot.slane %v174, 2
    %v176 = vadd.f32 %v174, %v175
    %v177 = vrot.slane %v176, 1
    %v178 = vadd.f32 %v176, %v177
    %v179 = vsel %vm56, %v151, 0.0
    %v180 = vrot.slane %v179, 4
    %v181 = vadd.f32 %v179, %v180
    %v182 = vrot.slane %v181, 2
    %v183 = vadd.f32 %v181, %v182
    %v184 = vrot.slane %v183, 1
    %v185 = vadd.f32 %v183, %v184
    %v186 = vsel %vm56, %v154, 0.0
    %v187 = vrot.slane %v186, 4
    %v188 = vadd.f32 %v186, %v187
    %v189 = vrot.slane %v188, 2
    %v190 = vadd.f32 %v188, %v189
    %v191 = vrot.slane %v190, 1
    %v192 = vadd.f32 %v190, %v191
    %v193 = vsel %vm56, %v155, 0.0
    %v194 = vrot.slane %v193, 4
    %v195 = vadd.f32 %v193, %v194
    %v196 = vrot.slane %v195, 2
    %v197 = vadd.f32 %v195, %v196
    %v198 = vrot.slane %v197, 1
    %v199 = vadd.f32 %v197, %v198
    %v200 = vsel %vm56, %v158, 0.0
    %v201 = vrot.slane %v200, 4
    %v202 = vadd.f32 %v200, %v201
    %v203 = vrot.slane %v202, 2
    %v204 = vadd.f32 %v202, %v203
    %v205 = vrot.slane %v204, 1
    %v206 = vadd.f32 %v204, %v205
    %v207 = vsel %vm56, %v159, 0.0
    %v208 = vrot.slane %v207, 4
    %v209 = vadd.f32 %v207, %v208
    %v210 = vrot.slane %v209, 2
    %v211 = vadd.f32 %v209, %v210
    %v212 = vrot.slane %v211, 1
    %v213 = vadd.f32 %v211, %v212
    %v214 = vsel %vm56, %v162, 0.0
    %v215 = vrot.slane %v214, 4
    %v216 = vadd.f32 %v214, %v215
    %v217 = vrot.slane %v216, 2
    %v218 = vadd.f32 %v216, %v217
    %v219 = vrot.slane %v218, 1
    %v220 = vadd.f32 %v218, %v219
    %v221 = vsel %vm56, %v163, 0.0
    %v222 = vrot.slane %v221, 4
    %v223 = vadd.f32 %v221, %v222
    %v224 = vrot.slane %v223, 2
    %v225 = vadd.f32 %v223, %v224
    %v226 = vrot.slane %v225, 1
    %v227 = vadd.f32 %v225, %v226
    %v236 = vrot.slane %v185, 4
    %v237 = vrot.slane %v199, 4
    %v238 = vrot.slane %v213, 4
    %v239 = vrot.slane %v227, 4
    %v240 = vsel %vm56, %v178, %v236
    %v241 = vsel %vm56, %v192, %v237
    %v242 = vsel %vm56, %v206, %v238
    %v243 = vsel %vm56, %v220, %v239
    %v248 = vrcp.pop %v240
    %v249 = vmul.f32 %v240, %v248
    %v250 = vsub.f32 1.0, %v249
    %v251 = vmul.f32 %v248, %v250
    %v252 = vadd.f32 %v248, %v251
    %vm253 = vweird.f32 %v240
    %vm254 = vweird.f32 %v248
    %vm255 = vmor %vm253, %vm254
    %v256 = vsel %vm255, %v248, %v252
    %v257 = vand.u32 2147483647, %v240
    %vm258 = vcmp.eq.f32.partialorder %v257, 8.507059e+37
    %v259 = vand.u32 %v240, 2147483648
    %v260 = vor.u32 1.1754944e-38, %v259
    %v261 = vsel %vm258, %v260, %v256
    %v262 = vmul.f32 %v138, %v261
    %v263 = vrcp.pop %v241
    %v264 = vmul.f32 %v241, %v263
    %v265 = vsub.f32 1.0, %v264
    %v266 = vmul.f32 %v263, %v265
    %v267 = vadd.f32 %v263, %v266
    %vm268 = vweird.f32 %v241
    %vm269 = vweird.f32 %v263
    %vm270 = vmor %vm268, %vm269
    %v271 = vsel %vm270, %v263, %v267
    %v272 = vand.u32 2147483647, %v241
    %vm273 = vcmp.eq.f32.partialorder %v272, 8.507059e+37
    %v274 = vand.u32 %v241, 2147483648
    %v275 = vor.u32 1.1754944e-38, %v274
    %v276 = vsel %vm273, %v275, %v271
    %v277 = vmul.f32 %v140, %v276
    %v278 = vrcp.pop %v242
    %v279 = vmul.f32 %v242, %v278
    %v280 = vsub.f32 1.0, %v279
    %v281 = vmul.f32 %v278, %v280
    %v282 = vadd.f32 %v278, %v281
    %vm283 = vweird.f32 %v242
    %vm284 = vweird.f32 %v278
    %vm285 = vmor %vm283, %vm284
    %v286 = vsel %vm285, %v278, %v282
    %v287 = vand.u32 2147483647, %v242
    %vm288 = vcmp.eq.f32.partialorder %v287, 8.507059e+37
    %v289 = vand.u32 %v242, 2147483648
    %v290 = vor.u32 1.1754944e-38, %v289
    %v291 = vsel %vm288, %v290, %v286
    %v292 = vmul.f32 %v142, %v291
    %v293 = vrcp.pop %v243
    %v294 = vmul.f32 %v243, %v293
    %v295 = vsub.f32 1.0, %v294
    %v296 = vmul.f32 %v293, %v295
    %v297 = vadd.f32 %v293, %v296
    %vm298 = vweird.f32 %v243
    %vm299 = vweird.f32 %v293
    %vm300 = vmor %vm298, %vm299
    %v301 = vsel %vm300, %v293, %v297
    %v302 = vand.u32 2147483647, %v243
    %vm303 = vcmp.eq.f32.partialorder %v302, 8.507059e+37
    %v304 = vand.u32 %v243, 2147483648
    %v305 = vor.u32 1.1754944e-38, %v304
    %v306 = vsel %vm303, %v305, %v301
    %v307 = vmul.f32 %v144, %v306
    %308 = vst [vmem:[#allocation5] sm:$0xff] %v262
    %309 = vst [vmem:[#allocation5 + $0x8] sm:$0xff] %v277
    %310 = vst [vmem:[#allocation5 + $0x10] sm:$0xff] %v292
    %311 = vst [vmem:[#allocation5 + $0x18] sm:$0xff] %v307
    // Predicated region
    $region10: #{tpu_custom_call.1} parent=1 // pred_check
      _
    $region11: #{tpu_custom_call.1} parent=1 // pred_check_branch
      %313 = sbr.rel (0) target = $region13
    $region12: #{tpu_custom_call.1} parent=1 // pred_region
      %315 = vsyncadd [#allocation4], 0
      %s316 = sshll.u32 [#allocation5], 4
      %s317 = int_to_ptr.vmem [resolvable:$true] %s316
      %s318 = sshll.u32 %s1, 4
      %s319 = int_to_ptr.hbm [resolvable:$true] %s318
      %324 = dma.vmem_to_hbm [thread:$0]  %s317, 512, %s319, [#allocation4], 128, 128, 8
    $region13: #{tpu_custom_call.1} parent=1 // pred_fallthru
      _
    // Predicated region
    $region14: #{tpu_custom_call.1} parent=1 // pred_check
      _
    $region15: #{tpu_custom_call.1} parent=1 // pred_check_branch
      %326 = sbr.rel (0) target = $region17
    $region16: #{tpu_custom_call.1} parent=1 // pred_region
      %328 = dma.done [#allocation4], 512
    $region17: #{tpu_custom_call.1} parent=1 // pred_fallthru
      _
    %329 = vsyncpa [#allocation3], 1
    %330 = vsyncpa [#allocation4], 1

</llo_original>
